<compile_context>
chip_gen: v6e
topology: v6e:2x2x1
jax: 0.10.0
libtpu: 0.0.40
codegen_flags: <defaults>
</compile_context>

<pallas_src>
import functools

import jax
import jax.numpy as jnp
from jax import lax
from jax.experimental import pallas as pl
from jax.experimental.pallas import tpu as pltpu


_LANE = 128
_VMEM = pl.BlockSpec(memory_space=pltpu.MemorySpace.VMEM)


# ----------------------------------------------------------------------------
# Fused Pallas kernel: all GCN layers + global mean pool in one invocation
# ----------------------------------------------------------------------------
def _gcn_fused_kernel(*refs, num_layers, compute_dtype):
    """refs = (x, adj_hat, pool, w_0, b_0, ..., w_{L-1}, b_{L-1}, out)."""
    x_ref, adj_ref, pool_ref = refs[0], refs[1], refs[2]
    wb_refs = refs[3:3 + 2 * num_layers]
    out_ref = refs[3 + 2 * num_layers]

    adj = adj_ref[...]                       # [N, N], compute_dtype
    h = x_ref[...]                           # [N, F_pad], compute_dtype
    h32 = h.astype(jnp.float32)

    for layer in range(num_layers):
        w = wb_refs[2 * layer][...]          # [F_in_pad, F_out_pad], compute_dtype
        b = wb_refs[2 * layer + 1][...]      # [1, F_out_pad], float32
        # X @ W  (MXU, f32 accumulation), then A_hat @ (XW) + b
        xw = jnp.dot(h, w, preferred_element_type=jnp.float32)
        h32 = jnp.dot(adj, xw.astype(compute_dtype),
                      preferred_element_type=jnp.float32) + b
        if layer < num_layers - 1:
            h32 = jnp.maximum(h32, jnp.float32(0.0))
            # TODO(synk): training-mode dropout omitted (identity == eval/inference).
        h = h32.astype(compute_dtype)

    # global mean pool: pool[g, i] = 1/|graph g| if batch[i] == g
    out_ref[...] = jnp.dot(pool_ref[...], h32, preferred_element_type=jnp.float32)


# ----------------------------------------------------------------------------
# Wrapper: glue (adjacency normalization, pooling matrix, lane padding)
# ----------------------------------------------------------------------------
def _round_up(v, m):
    return ((v + m - 1) // m) * m


def _pad_last(a, target):
    pad = target - a.shape[-1]
    if pad <= 0:
        return a
    widths = [(0, 0)] * (a.ndim - 1) + [(0, pad)]
    return jnp.pad(a, widths)


def gcn_forward(x, edge_index, batch, params, *, num_graphs, out_channels,
                compute_dtype=jnp.bfloat16):
    """params: list of (w [f_in, f_out], b [f_out]) per GCNConv layer."""
    n = x.shape[0]
    num_layers = len(params)

    # --- normalized dense adjacency A_hat = D^{-1/2}(A+I)D^{-1/2} (glue, jittable)
    src, dst = edge_index[0], edge_index[1]                   # messages src -> dst
    adj = jnp.zeros((n, n), jnp.float32).at[dst, src].add(1.0)
    adj = adj + jnp.eye(n, dtype=jnp.float32)                 # self loops
    deg = jnp.sum(adj, axis=1)                                # in-degree + 1
    dinv = lax.rsqrt(jnp.maximum(deg, 1.0))
    adj_hat = (adj * dinv[:, None] * dinv[None, :]).astype(compute_dtype)

    # --- mean-pool matrix, num_graphs is static (no host sync)
    onehot = (batch[None, :] == jnp.arange(num_graphs)[:, None]).astype(jnp.float32)
    counts = jnp.maximum(jnp.sum(onehot, axis=1, keepdims=True), 1.0)
    pool = onehot / counts                                    # [G, N], float32

    # --- zero-pad feature dims to 128 lanes; cast matmul operands to bf16
    fin_pad = _round_up(x.shape[1], _LANE)
    x_pad = _pad_last(x.astype(jnp.float32), fin_pad).astype(compute_dtype)

    flat_wb = []
    for (w, b) in params:
        fout_pad = _round_up(w.shape[1], _LANE)
        w_pad = jnp.zeros((fin_pad, fout_pad), jnp.float32)
        w_pad = w_pad.at[:w.shape[0], :w.shape[1]].set(w.astype(jnp.float32))
        b_pad = _pad_last(b.reshape(1, -1).astype(jnp.float32), fout_pad)
        flat_wb += [w_pad.astype(compute_dtype), b_pad]
        fin_pad = fout_pad
    last_pad = fin_pad

    kern = functools.partial(_gcn_fused_kernel, num_layers=num_layers,
                             compute_dtype=compute_dtype)
    out_pad = pl.pallas_call(
        kern,
        out_shape=jax.ShapeDtypeStruct((num_graphs, last_pad), jnp.float32),
        in_specs=[_VMEM] * (3 + 2 * num_layers),
        out_specs=_VMEM,
    )(x_pad, adj_hat, pool, *flat_wb)

    return out_pad[:, :out_channels]


# ----------------------------------------------------------------------------
# Parameter init matching GCNModel layer layout
# ----------------------------------------------------------------------------
def init_params(key, in_channels, hidden_channels, out_channels, num_layers=2):
    dims = [in_channels] + [hidden_channels] * (num_layers - 1) + [out_channels]
    keys = jax.random.split(key, num_layers)
    params = []
    for layer in range(num_layers):
        fin, fout = dims[layer], dims[layer + 1]
        kw, _ = jax.random.split(keys[layer])
        scale = 1.0 / jnp.sqrt(jnp.float32(fin))
        w = jax.random.uniform(kw, (fin, fout), jnp.float32, -scale, scale)
        b = jnp.zeros((fout,), jnp.float32)   # PyG GCNConv bias init = zeros
        params.append((w, b))
    return params


# ----------------------------------------------------------------------------
if __name__ == "__main__":
    IN_CHANNELS = 8
    HIDDEN = 16
    OUT_CHANNELS = 4
    NUM_LAYERS = 2
    N_PER_GRAPH = 8
    NUM_GRAPHS = 2
    N = N_PER_GRAPH * NUM_GRAPHS

    key = jax.random.PRNGKey(0)
    k_x, k_p = jax.random.split(key)

    x = jax.random.normal(k_x, (N, IN_CHANNELS), jnp.float32)

    # bidirectional ring inside each graph -> every node has incoming edges
    src_list, dst_list = [], []
    for g in range(NUM_GRAPHS):
        base = g * N_PER_GRAPH
        for i in range(N_PER_GRAPH):
            a, b = base + i, base + (i + 1) % N_PER_GRAPH
            src_list += [a, b]
            dst_list += [b, a]
    edge_index = jnp.array([src_list, dst_list], dtype=jnp.int32)   # [2, E]
    batch = jnp.repeat(jnp.arange(NUM_GRAPHS, dtype=jnp.int32), N_PER_GRAPH)

    params = init_params(k_p, IN_CHANNELS, HIDDEN, OUT_CHANNELS, NUM_LAYERS)

    fwd = jax.jit(functools.partial(gcn_forward,
                                    num_graphs=NUM_GRAPHS,
                                    out_channels=OUT_CHANNELS))
    out = jax.block_until_ready(fwd(x, edge_index, batch, params))

    assert out.shape == (NUM_GRAPHS, OUT_CHANNELS), out.shape
    assert bool(jnp.all(jnp.isfinite(out)))
    print("KERNEL_OK")
</pallas_src>

<mosaic_0001>
module attributes {stable_mosaic.version = 11 : i64} {
  func.func private @main(%arg0: i32) attributes {dimension_semantics = [#tpu.dimension_semantics<core_parallel>], iteration_bounds = array<i64: 2>, tpu.core_type = #tpu.core_type<sc_scalar_subcore>, window_params = []} {
    return
  }
}

module attributes {stable_mosaic.version = 11 : i64} {
  func.func private @main(%arg0: i32) attributes {dimension_semantics = [#tpu.dimension_semantics<core_parallel>], iteration_bounds = array<i64: 2>, tpu.core_type = #tpu.core_type<sc_scalar_subcore>, window_params = []} {
    return
  }
}

module attributes {stable_mosaic.version = 11 : i64} {
  func.func @_gcn_fused_kernel(%arg0: memref<16x128xbf16, #tpu.memory_space<vmem>>, %arg1: memref<16x16xbf16, #tpu.memory_space<vmem>>, %arg2: memref<2x16xf32, #tpu.memory_space<vmem>>, %arg3: memref<128x128xbf16, #tpu.memory_space<vmem>>, %arg4: memref<1x128xf32, #tpu.memory_space<vmem>>, %arg5: memref<128x128xbf16, #tpu.memory_space<vmem>>, %arg6: memref<1x128xf32, #tpu.memory_space<vmem>>, %arg7: memref<2x128xf32, #tpu.memory_space<vmem>>) attributes {dimension_semantics = [], scalar_prefetch = 0 : i64, scratch_operands = 0 : i64, tpu.core_type = #tpu.core_type<tc>} {
    %c0 = arith.constant 0 : index
    %c0_0 = arith.constant 0 : index
    %0 = vector.load %arg1[%c0, %c0_0] : memref<16x16xbf16, #tpu.memory_space<vmem>>, vector<16x16xbf16>
    %c0_1 = arith.constant 0 : index
    %c0_2 = arith.constant 0 : index
    %1 = vector.load %arg0[%c0_1, %c0_2] : memref<16x128xbf16, #tpu.memory_space<vmem>>, vector<16x128xbf16>
    %c0_3 = arith.constant 0 : index
    %c0_4 = arith.constant 0 : index
    %2 = vector.load %arg3[%c0_3, %c0_4] : memref<128x128xbf16, #tpu.memory_space<vmem>>, vector<128x128xbf16>
    %c0_5 = arith.constant 0 : index
    %c0_6 = arith.constant 0 : index
    %3 = vector.load %arg4[%c0_5, %c0_6] : memref<1x128xf32, #tpu.memory_space<vmem>>, vector<1x128xf32>
    %cst = arith.constant dense<0.000000e+00> : vector<16x128xf32>
    %4 = tpu.matmul %1, %2, %cst {dimension_numbers = #tpu.dot_dimension_numbers<[1], [0], [0], [1], [0, 0, 1, 1], [], []>} : vector<16x128xbf16>, vector<128x128xbf16>, vector<16x128xf32> -> vector<16x128xf32>
    %5 = arith.truncf %4 : vector<16x128xf32> to vector<16x128xbf16>
    %cst_7 = arith.constant dense<0.000000e+00> : vector<16x128xf32>
    %6 = tpu.matmul %0, %5, %cst_7 {dimension_numbers = #tpu.dot_dimension_numbers<[1], [0], [0], [1], [0, 0, 1, 1], [], []>} : vector<16x16xbf16>, vector<16x128xbf16>, vector<16x128xf32> -> vector<16x128xf32>
    %7 = vector.broadcast %3 : vector<1x128xf32> to vector<16x128xf32>
    %8 = arith.addf %6, %7 : vector<16x128xf32>
    %cst_8 = arith.constant 0.000000e+00 : f32
    %9 = vector.broadcast %cst_8 : f32 to vector<16x128xf32>
    %10 = arith.maximumf %8, %9 : vector<16x128xf32>
    %11 = arith.truncf %10 : vector<16x128xf32> to vector<16x128xbf16>
    %c0_9 = arith.constant 0 : index
    %c0_10 = arith.constant 0 : index
    %12 = vector.load %arg5[%c0_9, %c0_10] : memref<128x128xbf16, #tpu.memory_space<vmem>>, vector<128x128xbf16>
    %c0_11 = arith.constant 0 : index
    %c0_12 = arith.constant 0 : index
    %13 = vector.load %arg6[%c0_11, %c0_12] : memref<1x128xf32, #tpu.memory_space<vmem>>, vector<1x128xf32>
    %cst_13 = arith.constant dense<0.000000e+00> : vector<16x128xf32>
    %14 = tpu.matmul %11, %12, %cst_13 {dimension_numbers = #tpu.dot_dimension_numbers<[1], [0], [0], [1], [0, 0, 1, 1], [], []>} : vector<16x128xbf16>, vector<128x128xbf16>, vector<16x128xf32> -> vector<16x128xf32>
    %15 = arith.truncf %14 : vector<16x128xf32> to vector<16x128xbf16>
    %cst_14 = arith.constant dense<0.000000e+00> : vector<16x128xf32>
    %16 = tpu.matmul %0, %15, %cst_14 {dimension_numbers = #tpu.dot_dimension_numbers<[1], [0], [0], [1], [0, 0, 1, 1], [], []>} : vector<16x16xbf16>, vector<16x128xbf16>, vector<16x128xf32> -> vector<16x128xf32>
    %17 = vector.broadcast %13 : vector<1x128xf32> to vector<16x128xf32>
    %18 = arith.addf %16, %17 : vector<16x128xf32>
    %c0_15 = arith.constant 0 : index
    %c0_16 = arith.constant 0 : index
    %19 = vector.load %arg2[%c0_15, %c0_16] : memref<2x16xf32, #tpu.memory_space<vmem>>, vector<2x16xf32>
    %cst_17 = arith.constant dense<0.000000e+00> : vector<2x128xf32>
    %20 = tpu.matmul %19, %18, %cst_17 {dimension_numbers = #tpu.dot_dimension_numbers<[1], [0], [0], [1], [0, 0, 1, 1], [], []>} : vector<2x16xf32>, vector<16x128xf32>, vector<2x128xf32> -> vector<2x128xf32>
    %c0_18 = arith.constant 0 : index
    %c0_19 = arith.constant 0 : index
    %21 = vector.load %arg7[%c0_18, %c0_19] : memref<2x128xf32, #tpu.memory_space<vmem>>, vector<2x128xf32>
    tpu.vector_store %arg7[%c0_18, %c0_19], %20 {strides = array<i32>} : memref<2x128xf32, #tpu.memory_space<vmem>>, vector<2x128xf32>,
    return
  }
}

</mosaic_0001>

<llo_original>
// kernel: gcn_forward.1
$region0: #{gcn_forward.1}
  #allocation0 [shape = 'u32[]', space=smem, size = 0x4, offset = 0x4, fixed_abs, tag = 'smem constant byte address 0x4 - core index']
  #allocation1 [shape = 'u32[144,128]{1,0:T(1,128)}', space=vmem, size = 0x12000, scoped, tag = 'internal scratch']
  %s0 = inlined_call_operand.vmem [shape: bf16[16,128], index: 0, kind: input, shape index: {}]
  %s1 = inlined_call_operand.vmem [shape: bf16[16,16], index: 1, kind: input, shape index: {}]
  %s2 = inlined_call_operand.vmem [shape: f32[2,16], index: 2, kind: input, shape index: {}]
  %s3 = inlined_call_operand.vmem [shape: bf16[128,128], index: 3, kind: input, shape index: {}]
  %s4 = inlined_call_operand.vmem [shape: f32[1,128], index: 4, kind: input, shape index: {}]
  %s5 = inlined_call_operand.vmem [shape: bf16[128,128], index: 5, kind: input, shape index: {}]
  %s6 = inlined_call_operand.vmem [shape: f32[1,128], index: 6, kind: input, shape index: {}]
  %s7 = inlined_call_operand.hbm [shape: f32[2,128], index: 7, kind: output, shape index: {}]
  %s8 = sld [smem:[#allocation0]]
  $region38: #{gcn_forward.1} parent=0
    _
  %s10 = ssub.s32 1, %s8
  %s11 = scalar_select 0, %s10, %s8
  $region1: #{gcn_forward.1} parent=0
    #allocation2 [shape = 'u8[1024]{0}', space=vmem, size = 0x400, scoped, tag = 'output window, operand 0, single buffered']
    #allocation3 [shape = 's32[1]{0}', space=sflag, size = 0x4, scoped, tag = 'scoped memory for gcn_forward.1']
    %12 = vsyncpa [#allocation3], 0
    // Predicated region
    $region2: #{gcn_forward.1} parent=1 // pred_check
      _
    $region3: #{gcn_forward.1} parent=1 // pred_check_branch
      %14 = sbr.rel (0) target = $region5
    $region4: #{gcn_forward.1} parent=1 // pred_region
      _
    $region5: #{gcn_forward.1} parent=1 // pred_fallthru
      _
    // Predicated region
    $region6: #{gcn_forward.1} parent=1 // pred_check
      _
    $region7: #{gcn_forward.1} parent=1 // pred_check_branch
      %16 = sbr.rel (0) target = $region9
    $region8: #{gcn_forward.1} parent=1 // pred_region
      _
    $region9: #{gcn_forward.1} parent=1 // pred_fallthru
      _
    // Predicated region
    $region10: #{gcn_forward.1} parent=1 // pred_check
      _
    $region11: #{gcn_forward.1} parent=1 // pred_check_branch
      %18 = sbr.rel (0) target = $region13
    $region12: #{gcn_forward.1} parent=1 // pred_region
      _
    $region13: #{gcn_forward.1} parent=1 // pred_fallthru
      _
    // Predicated region
    $region14: #{gcn_forward.1} parent=1 // pred_check
      _
    $region15: #{gcn_forward.1} parent=1 // pred_check_branch
      %20 = sbr.rel (0) target = $region17
    $region16: #{gcn_forward.1} parent=1 // pred_region
      _
    $region17: #{gcn_forward.1} parent=1 // pred_fallthru
      _
    // Predicated region
    $region18: #{gcn_forward.1} parent=1 // pred_check
      _
    $region19: #{gcn_forward.1} parent=1 // pred_check_branch
      %22 = sbr.rel (0) target = $region21
    $region20: #{gcn_forward.1} parent=1 // pred_region
      _
    $region21: #{gcn_forward.1} parent=1 // pred_fallthru
      _
    // Predicated region
    $region22: #{gcn_forward.1} parent=1 // pred_check
      _
    $region23: #{gcn_forward.1} parent=1 // pred_check_branch
      %24 = sbr.rel (0) target = $region25
    $region24: #{gcn_forward.1} parent=1 // pred_region
      _
    $region25: #{gcn_forward.1} parent=1 // pred_fallthru
      _
    // Predicated region
    $region26: #{gcn_forward.1} parent=1 // pred_check
      _
    $region27: #{gcn_forward.1} parent=1 // pred_check_branch
      %26 = sbr.rel (0) target = $region29
    $region28: #{gcn_forward.1} parent=1 // pred_region
      _
    $region29: #{gcn_forward.1} parent=1 // pred_fallthru
      _
    %v28 = vld [vmem:[%s1] sm:$0xf]
    %v29 = vld [vmem:[%s1 + $0x4] sm:$0xf]
    %v30 = vld [vmem:[%s0] sm:$0xf]
    %v31 = vld [vmem:[%s0 + $0x4] sm:$0xf]
    %v32 = vld [vmem:[%s3] sm:$0xf]
    %v33 = vld [vmem:[%s3 + $0x4] sm:$0xf]
    %v34 = vld [vmem:[%s3 + $0x8] sm:$0xf]
    %v35 = vld [vmem:[%s3 + $0xc] sm:$0xf]
    %v36 = vld [vmem:[%s3 + $0x10] sm:$0xf]
    %v37 = vld [vmem:[%s3 + $0x14] sm:$0xf]
    %v38 = vld [vmem:[%s3 + $0x18] sm:$0xf]
    %v39 = vld [vmem:[%s3 + $0x1c] sm:$0xf]
    %v40 = vld [vmem:[%s3 + $0x20] sm:$0xf]
    %v41 = vld [vmem:[%s3 + $0x24] sm:$0xf]
    %v42 = vld [vmem:[%s3 + $0x28] sm:$0xf]
    %v43 = vld [vmem:[%s3 + $0x2c] sm:$0xf]
    %v44 = vld [vmem:[%s3 + $0x30] sm:$0xf]
    %v45 = vld [vmem:[%s3 + $0x34] sm:$0xf]
    %v46 = vld [vmem:[%s3 + $0x38] sm:$0xf]
    %v47 = vld [vmem:[%s3 + $0x3c] sm:$0xf]
    %v48 = vld [vmem:[%s4] sm:$0x1]
    %v51 = vunpack.c.l.b16 %v30
    %v52 = vunpack.c.l.b16 %v31
    %v53 = vpack.c.b16 %v52, %v51
    %v71 = vunpack.c.l.b16 %v32
    %v72 = vunpack.c.l.b16 %v33
    %v73 = vunpack.c.l.b16 %v34
    %v74 = vunpack.c.l.b16 %v35
    %v75 = vunpack.c.l.b16 %v36
    %v76 = vunpack.c.l.b16 %v37
    %v77 = vunpack.c.l.b16 %v38
    %v78 = vunpack.c.l.b16 %v39
    %v79 = vunpack.c.l.b16 %v40
    %v80 = vunpack.c.l.b16 %v41
    %v81 = vunpack.c.l.b16 %v42
    %v82 = vunpack.c.l.b16 %v43
    %v83 = vunpack.c.l.b16 %v44
    %v84 = vunpack.c.l.b16 %v45
    %v85 = vunpack.c.l.b16 %v46
    %v86 = vunpack.c.l.b16 %v47
    %v87 = vpack.c.b16 %v72, %v71
    %v88 = vpack.c.b16 %v74, %v73
    %v89 = vpack.c.b16 %v76, %v75
    %v90 = vpack.c.b16 %v78, %v77
    %v91 = vpack.c.b16 %v80, %v79
    %v92 = vpack.c.b16 %v82, %v81
    %v93 = vpack.c.b16 %v84, %v83
    %v94 = vpack.c.b16 %v86, %v85
    %103 = vmatprep.subr.bf16.mxu0 0
    %104 = vmatpush1.bf16.msra.mxu0 %v94
    %105 = vmatprep.subr.bf16.mxu0 0
    %106 = vmatpush1.bf16.msra.mxu0 %v93
    %107 = vmatprep.subr.bf16.mxu0 0
    %108 = vmatpush1.bf16.msra.mxu0 %v92
    %109 = vmatprep.subr.bf16.mxu0 0
    %110 = vmatpush1.bf16.msra.mxu0 %v91
    %111 = vmatprep.subr.bf16.mxu0 0
    %112 = vmatpush1.bf16.msra.mxu0 %v90
    %113 = vmatprep.subr.bf16.mxu0 0
    %114 = vmatpush1.bf16.msra.mxu0 %v89
    %115 = vmatprep.subr.bf16.mxu0 0
    %116 = vmatpush1.bf16.msra.mxu0 %v88
    %117 = vmatprep.subr.bf16.mxu0 0
    %118 = vmatpush1.bf16.msra.mxu0 %v87
    %119 = vmatprep.subr.bf16.mxu0 0
    %120 = vmatpush2.bf16.msra.mxu0 0
    %121 = vmatprep.subr.bf16.mxu0 0
    %122 = vmatpush2.bf16.msra.mxu0 0
    %123 = vmatprep.subr.bf16.mxu0 0
    %124 = vmatpush2.bf16.msra.mxu0 0
    %125 = vmatprep.subr.bf16.mxu0 0
    %126 = vmatpush2.bf16.msra.mxu0 0
    %127 = vmatprep.subr.bf16.mxu0 0
    %128 = vmatpush2.bf16.msra.mxu0 0
    %129 = vmatprep.subr.bf16.mxu0 0
    %130 = vmatpush2.bf16.msra.mxu0 0
    %131 = vmatprep.subr.bf16.mxu0 0
    %132 = vmatpush2.bf16.msra.mxu0 0
    %133 = vmatprep.subr.bf16.mxu0 0
    %134 = vmatpush2.bf16.msra.mxu0 0
    %135 = vmatprep.mubr.bf16.mxu0 0
    %136 = vmatmul.mubr.bf16.gmra.mxu0 %v53
    %v137 = vpop.f32.mrf.mxu0
    %v138 = vadd.f32 0.0, %v137
    %v139 = vpop.f32.mrf.mxu0
    %v140 = vpop.f32.mrf.mxu0
    %v141 = vadd.f32 0.0, %v140
    %v142 = vpop.f32.mrf.mxu0
    %143 = vdwg.mxu0
    %v144 = vpack.c.bf16 %v141, %v138
    %v146 = vlaneseq
    %v147 = vshrl.u32 %v146, 7
    %v148 = vsub.s32 0, %v147
    %v149 = vrot.slane %v48, %v148
    %v153 = vunpack.c.l.b16 %v28
    %v154 = vunpack.c.l.b16 %v29
    %v155 = vpack.c.b16 %v154, %v153
    %vm156 = vcmask 130048
    %v158 = vsel %vm156, %v155, 0
    %160 = vmatprep.subr.bf16.mxu0 0
    %161 = vmatpush1.bf16.msra.mxu0 0
    %162 = vmatprep.subr.bf16.mxu0 0
    %163 = vmatpush1.bf16.msra.mxu0 0
    %164 = vmatprep.subr.bf16.mxu0 0
    %165 = vmatpush1.bf16.msra.mxu0 0
    %166 = vmatprep.subr.bf16.mxu0 0
    %167 = vmatpush1.bf16.msra.mxu0 0
    %168 = vmatprep.subr.bf16.mxu0 0
    %169 = vmatpush1.bf16.msra.mxu0 0
    %170 = vmatprep.subr.bf16.mxu0 0
    %171 = vmatpush1.bf16.msra.mxu0 0
    %172 = vmatprep.subr.bf16.mxu0 0
    %173 = vmatpush1.bf16.msra.mxu0 0
    %174 = vmatprep.subr.bf16.mxu0 0
    %175 = vmatpush1.bf16.msra.mxu0 %v144
    %176 = vmatprep.subr.bf16.mxu0 0
    %177 = vmatpush2.bf16.msra.mxu0 0
    %178 = vmatprep.subr.bf16.mxu0 0
    %179 = vmatpush2.bf16.msra.mxu0 0
    %180 = vmatprep.subr.bf16.mxu0 0
    %181 = vmatpush2.bf16.msra.mxu0 0
    %182 = vmatprep.subr.bf16.mxu0 0
    %183 = vmatpush2.bf16.msra.mxu0 0
    %184 = vmatprep.subr.bf16.mxu0 0
    %185 = vmatpush2.bf16.msra.mxu0 0
    %186 = vmatprep.subr.bf16.mxu0 0
    %187 = vmatpush2.bf16.msra.mxu0 0
    %188 = vmatprep.subr.bf16.mxu0 0
    %189 = vmatpush2.bf16.msra.mxu0 0
    %190 = vmatprep.subr.bf16.mxu0 0
    %191 = vmatpush2.bf16.msra.mxu0 0
    %192 = vmatprep.mubr.bf16.mxu0 0
    %193 = vmatmul.mubr.bf16.gmra.mxu0 %v158
    %v194 = vpop.f32.mrf.mxu0
    %v195 = vadd.f32 %v149, %v194
    %v196 = vpop.f32.mrf.mxu0
    %v197 = vpop.f32.mrf.mxu0
    %v198 = vadd.f32 %v149, %v197
    %v199 = vpop.f32.mrf.mxu0
    %200 = vdwg.mxu0
    %v201 = vmax.f32 %v195, 0.0
    %v202 = vmax.f32 %v198, 0.0
    %v203 = vpack.c.bf16 %v202, %v201
    %v204 = vld [vmem:[%s5] sm:$0xf]
    %v205 = vld [vmem:[%s5 + $0x4] sm:$0xf]
    %v206 = vld [vmem:[%s5 + $0x8] sm:$0xf]
    %v207 = vld [vmem:[%s5 + $0xc] sm:$0xf]
    %v208 = vld [vmem:[%s5 + $0x10] sm:$0xf]
    %v209 = vld [vmem:[%s5 + $0x14] sm:$0xf]
    %v210 = vld [vmem:[%s5 + $0x18] sm:$0xf]
    %v211 = vld [vmem:[%s5 + $0x1c] sm:$0xf]
    %v212 = vld [vmem:[%s5 + $0x20] sm:$0xf]
    %v213 = vld [vmem:[%s5 + $0x24] sm:$0xf]
    %v214 = vld [vmem:[%s5 + $0x28] sm:$0xf]
    %v215 = vld [vmem:[%s5 + $0x2c] sm:$0xf]
    %v216 = vld [vmem:[%s5 + $0x30] sm:$0xf]
    %v217 = vld [vmem:[%s5 + $0x34] sm:$0xf]
    %v218 = vld [vmem:[%s5 + $0x38] sm:$0xf]
    %v219 = vld [vmem:[%s5 + $0x3c] sm:$0xf]
    %v220 = vld [vmem:[%s6] sm:$0x1]
    %v237 = vunpack.c.l.b16 %v204
    %v238 = vunpack.c.l.b16 %v205
    %v239 = vunpack.c.l.b16 %v206
    %v240 = vunpack.c.l.b16 %v207
    %v241 = vunpack.c.l.b16 %v208
    %v242 = vunpack.c.l.b16 %v209
    %v243 = vunpack.c.l.b16 %v210
    %v244 = vunpack.c.l.b16 %v211
    %v245 = vunpack.c.l.b16 %v212
    %v246 = vunpack.c.l.b16 %v213
    %v247 = vunpack.c.l.b16 %v214
    %v248 = vunpack.c.l.b16 %v215
    %v249 = vunpack.c.l.b16 %v216
    %v250 = vunpack.c.l.b16 %v217
    %v251 = vunpack.c.l.b16 %v218
    %v252 = vunpack.c.l.b16 %v219
    %v253 = vpack.c.b16 %v238, %v237
    %v254 = vpack.c.b16 %v240, %v239
    %v255 = vpack.c.b16 %v242, %v241
    %v256 = vpack.c.b16 %v244, %v243
    %v257 = vpack.c.b16 %v246, %v245
    %v258 = vpack.c.b16 %v248, %v247
    %v259 = vpack.c.b16 %v250, %v249
    %v260 = vpack.c.b16 %v252, %v251
    %269 = vmatprep.subr.bf16.mxu0 0
    %270 = vmatpush1.bf16.msra.mxu0 %v260
    %271 = vmatprep.subr.bf16.mxu0 0
    %272 = vmatpush1.bf16.msra.mxu0 %v259
    %273 = vmatprep.subr.bf16.mxu0 0
    %274 = vmatpush1.bf16.msra.mxu0 %v258
    %275 = vmatprep.subr.bf16.mxu0 0
    %276 = vmatpush1.bf16.msra.mxu0 %v257
    %277 = vmatprep.subr.bf16.mxu0 0
    %278 = vmatpush1.bf16.msra.mxu0 %v256
    %279 = vmatprep.subr.bf16.mxu0 0
    %280 = vmatpush1.bf16.msra.mxu0 %v255
    %281 = vmatprep.subr.bf16.mxu0 0
    %282 = vmatpush1.bf16.msra.mxu0 %v254
    %283 = vmatprep.subr.bf16.mxu0 0
    %284 = vmatpush1.bf16.msra.mxu0 %v253
    %285 = vmatprep.subr.bf16.mxu0 0
    %286 = vmatpush2.bf16.msra.mxu0 0
    %287 = vmatprep.subr.bf16.mxu0 0
    %288 = vmatpush2.bf16.msra.mxu0 0
    %289 = vmatprep.subr.bf16.mxu0 0
    %290 = vmatpush2.bf16.msra.mxu0 0
    %291 = vmatprep.subr.bf16.mxu0 0
    %292 = vmatpush2.bf16.msra.mxu0 0
    %293 = vmatprep.subr.bf16.mxu0 0
    %294 = vmatpush2.bf16.msra.mxu0 0
    %295 = vmatprep.subr.bf16.mxu0 0
    %296 = vmatpush2.bf16.msra.mxu0 0
    %297 = vmatprep.subr.bf16.mxu0 0
    %298 = vmatpush2.bf16.msra.mxu0 0
    %299 = vmatprep.subr.bf16.mxu0 0
    %300 = vmatpush2.bf16.msra.mxu0 0
    %301 = vmatprep.mubr.bf16.mxu0 0
    %302 = vmatmul.mubr.bf16.gmra.mxu0 %v203
    %v303 = vpop.f32.mrf.mxu0
    %v304 = vadd.f32 0.0, %v303
    %v305 = vpop.f32.mrf.mxu0
    %v306 = vpop.f32.mrf.mxu0
    %v307 = vadd.f32 0.0, %v306
    %v308 = vpop.f32.mrf.mxu0
    %309 = vdwg.mxu0
    %v310 = vpack.c.bf16 %v307, %v304
    %v312 = vlaneseq
    %v313 = vshrl.u32 %v312, 7
    %v314 = vsub.s32 0, %v313
    %v315 = vrot.slane %v220, %v314
    %317 = vmatprep.subr.bf16.mxu0 0
    %318 = vmatpush1.bf16.msra.mxu0 0
    %319 = vmatprep.subr.bf16.mxu0 0
    %320 = vmatpush1.bf16.msra.mxu0 0
    %321 = vmatprep.subr.bf16.mxu0 0
    %322 = vmatpush1.bf16.msra.mxu0 0
    %323 = vmatprep.subr.bf16.mxu0 0
    %324 = vmatpush1.bf16.msra.mxu0 0
    %325 = vmatprep.subr.bf16.mxu0 0
    %326 = vmatpush1.bf16.msra.mxu0 0
    %327 = vmatprep.subr.bf16.mxu0 0
    %328 = vmatpush1.bf16.msra.mxu0 0
    %329 = vmatprep.subr.bf16.mxu0 0
    %330 = vmatpush1.bf16.msra.mxu0 0
    %331 = vmatprep.subr.bf16.mxu0 0
    %332 = vmatpush1.bf16.msra.mxu0 %v310
    %333 = vmatprep.subr.bf16.mxu0 0
    %334 = vmatpush2.bf16.msra.mxu0 0
    %335 = vmatprep.subr.bf16.mxu0 0
    %336 = vmatpush2.bf16.msra.mxu0 0
    %337 = vmatprep.subr.bf16.mxu0 0
    %338 = vmatpush2.bf16.msra.mxu0 0
    %339 = vmatprep.subr.bf16.mxu0 0
    %340 = vmatpush2.bf16.msra.mxu0 0
    %341 = vmatprep.subr.bf16.mxu0 0
    %342 = vmatpush2.bf16.msra.mxu0 0
    %343 = vmatprep.subr.bf16.mxu0 0
    %344 = vmatpush2.bf16.msra.mxu0 0
    %345 = vmatprep.subr.bf16.mxu0 0
    %346 = vmatpush2.bf16.msra.mxu0 0
    %347 = vmatprep.subr.bf16.mxu0 0
    %348 = vmatpush2.bf16.msra.mxu0 0
    %349 = vmatprep.mubr.bf16.mxu0 0
    %350 = vmatmul.mubr.bf16.gmra.mxu0 %v158
    %v351 = vpop.f32.mrf.mxu0
    %v352 = vadd.f32 %v315, %v351
    %v353 = vpop.f32.mrf.mxu0
    %v354 = vpop.f32.mrf.mxu0
    %v355 = vadd.f32 %v315, %v354
    %v356 = vpop.f32.mrf.mxu0
    %357 = vdwg.mxu0
    %v358 = vld [vmem:[%s2] sm:$0x3]
    %v360 = vsel %vm156, %v358, 0
    %362 = vmatprep.subr.mxu0 0.0
    %363 = vmatpush1.msra.mxu0 0.0
    %364 = vmatprep.subr.mxu0 0.0
    %365 = vmatpush1.msra.mxu0 0.0
    %366 = vmatprep.subr.mxu0 0.0
    %367 = vmatpush1.msra.mxu0 0.0
    %368 = vmatprep.subr.mxu0 0.0
    %369 = vmatpush1.msra.mxu0 0.0
    %370 = vmatprep.subr.mxu0 0.0
    %371 = vmatpush1.msra.mxu0 0.0
    %372 = vmatprep.subr.mxu0 0.0
    %373 = vmatpush1.msra.mxu0 0.0
    %374 = vmatprep.subr.mxu0 0.0
    %375 = vmatpush1.msra.mxu0 0.0
    %376 = vmatprep.subr.mxu0 0.0
    %377 = vmatpush1.msra.mxu0 0.0
    %378 = vmatprep.subr.mxu0 0.0
    %379 = vmatpush1.msra.mxu0 0.0
    %380 = vmatprep.subr.mxu0 0.0
    %381 = vmatpush1.msra.mxu0 0.0
    %382 = vmatprep.subr.mxu0 0.0
    %383 = vmatpush1.msra.mxu0 0.0
    %384 = vmatprep.subr.mxu0 0.0
    %385 = vmatpush1.msra.mxu0 0.0
    %386 = vmatprep.subr.mxu0 0.0
    %387 = vmatpush1.msra.mxu0 0.0
    %388 = vmatprep.subr.mxu0 0.0
    %389 = vmatpush1.msra.mxu0 0.0
    %390 = vmatprep.subr.mxu0 0.0
    %391 = vmatpush1.msra.mxu0 %v355
    %392 = vmatprep.subr.mxu0 0.0
    %393 = vmatpush1.msra.mxu0 %v352
    %394 = vmatprep.subr.mxu0 0.0
    %395 = vmatpush2.msra.mxu0 0.0
    %396 = vmatprep.subr.mxu0 0.0
    %397 = vmatpush2.msra.mxu0 0.0
    %398 = vmatprep.subr.mxu0 0.0
    %399 = vmatpush2.msra.mxu0 0.0
    %400 = vmatprep.subr.mxu0 0.0
    %401 = vmatpush2.msra.mxu0 0.0
    %402 = vmatprep.subr.mxu0 0.0
    %403 = vmatpush2.msra.mxu0 0.0
    %404 = vmatprep.subr.mxu0 0.0
    %405 = vmatpush2.msra.mxu0 0.0
    %406 = vmatprep.subr.mxu0 0.0
    %407 = vmatpush2.msra.mxu0 0.0
    %408 = vmatprep.subr.mxu0 0.0
    %409 = vmatpush2.msra.mxu0 0.0
    %410 = vmatprep.subr.mxu0 0.0
    %411 = vmatpush2.msra.mxu0 0.0
    %412 = vmatprep.subr.mxu0 0.0
    %413 = vmatpush2.msra.mxu0 0.0
    %414 = vmatprep.subr.mxu0 0.0
    %415 = vmatpush2.msra.mxu0 0.0
    %416 = vmatprep.subr.mxu0 0.0
    %417 = vmatpush2.msra.mxu0 0.0
    %418 = vmatprep.subr.mxu0 0.0
    %419 = vmatpush2.msra.mxu0 0.0
    %420 = vmatprep.subr.mxu0 0.0
    %421 = vmatpush2.msra.mxu0 0.0
    %422 = vmatprep.subr.mxu0 0.0
    %423 = vmatpush2.msra.mxu0 0.0
    %424 = vmatprep.subr.mxu0 0.0
    %425 = vmatpush2.msra.mxu0 0.0
    %426 = vmatprep.mubr.f32.mxu0 0.0
    %427 = vmatmul.mubr.f32.gmra.mxu0 %v360
    %v428 = vpop.f32.mrf.mxu0
    %v429 = vadd.f32 0.0, %v428
    %v430 = vpop.f32.mrf.mxu0
    %431 = vdwg.mxu0
    %432 = vst [vmem:[#allocation2] sm:$0x3] %v429
    // Predicated region
    $region30: #{gcn_forward.1} parent=1 // pred_check
      _
    $region31: #{gcn_forward.1} parent=1 // pred_check_branch
      %434 = sbr.rel (0) target = $region33
    $region32: #{gcn_forward.1} parent=1 // pred_region
      %s436 = ssub.s32 32, 32
      %437 = vsyncadd [#allocation3], %s436
      %s439 = sshll.u32 [#allocation2], 4
      %s440 = int_to_ptr.vmem [resolvable:$true] %s439
      %442 = dma.vmem_to_hbm [thread:$0]  %s440, 32, %s7, [#allocation3]
    $region33: #{gcn_forward.1} parent=1 // pred_fallthru
      _
    // Predicated region
    $region34: #{gcn_forward.1} parent=1 // pred_check
      _
    $region35: #{gcn_forward.1} parent=1 // pred_check_branch
      %444 = sbr.rel (0) target = $region37
    $region36: #{gcn_forward.1} parent=1 // pred_region
      %445 = dma.done [#allocation3], 32
    $region37: #{gcn_forward.1} parent=1 // pred_fallthru
      _
    %446 = vsyncpa [#allocation3], 1

</llo_original>
